<compile_context>
chip_gen: v7x
topology: tpu7x:2x2x1
jax: 0.10.0
libtpu: 0.0.40
codegen_flags: <defaults>
</compile_context>

<pallas_src>
import jax
import jax.numpy as jnp
import numpy as np
from jax.experimental import pallas as pl
from jax.experimental.pallas import tpu as pltpu

NIL_INDEX = 0
EPSILON = 1e-8
ALPHA = 1


def _round_tile(T, row_bytes, budget_bytes, cap=512):
    """Largest row tile that divides T, is a multiple of 8, and fits the budget."""
    if T <= 8:
        return T
    target = min(cap, T, max(8, budget_bytes // max(1, row_bytes)))
    target -= target % 8
    for cand in range(int(target), 7, -8):
        if T % cand == 0:
            return cand
    return T  # fallback: one block covering the whole axis


# --------------------------------------------------------------------------- #
# Kernel 1: per-token cross-entropy pieces                                     #
# --------------------------------------------------------------------------- #
def _token_kernel(y_pred_ref, targets_ref, weight_ref, gp_ref, gl_ref, nl_ref):
    logits = y_pred_ref[0].astype(jnp.float32)           # (TR, C)
    tgt = targets_ref[0]                                  # (TR, 1) int32
    w = weight_ref[...].astype(jnp.float32)               # (1, C)

    # Numerically-stable log-softmax over the class (lane) dim.
    m = jnp.max(logits, axis=-1, keepdims=True)
    shifted = logits - m
    lse = jnp.log(jnp.sum(jnp.exp(shifted), axis=-1, keepdims=True))
    log_probs = shifted - lse                              # (TR, C)

    # One-hot gather of the golden class (TPU-friendly gather along lanes).
    cls = jax.lax.broadcasted_iota(jnp.int32, log_probs.shape, 1)
    onehot = cls == tgt                                    # (TR, C)
    golden_logp = jnp.sum(jnp.where(onehot, log_probs, 0.0),
                          axis=-1, keepdims=True)          # (TR, 1)
    golden_w = jnp.sum(jnp.where(onehot, w, 0.0),
                       axis=-1, keepdims=True)             # (TR, 1)

    # NIL class: static lane slice + (1,1) weight broadcast — no one-hot pass.
    nil_logp = log_probs[:, NIL_INDEX:NIL_INDEX + 1]       # (TR, 1)
    nil_w = w[:, NIL_INDEX:NIL_INDEX + 1]                  # (1, 1)

    gp_ref[0] = jnp.exp(golden_logp)                       # golden softmax prob (EUP)
    gl_ref[0] = -golden_w * golden_logp                    # weighted CE, reduction='none'
    nl_ref[0] = -nil_w * nil_logp


# --------------------------------------------------------------------------- #
# Kernel 2: bag-weighted loss, streaming the O(B*T^2) `packages` tensor        #
# --------------------------------------------------------------------------- #
def _bag_kernel(gp_row_ref, pkg_ref, gp_ref, gl_ref, nl_ref, margin_ref,
                mask_ref, out_ref):
    gp_row = gp_row_ref[0]                                 # (1, T) golden probs of ALL tokens
    pkg = pkg_ref[0].astype(jnp.float32)                   # (TI, T) native dtype upcast per tile
    gp = gp_ref[0]                                         # (TI, 1)
    gl = gl_ref[0]                                         # (TI, 1)
    nl = nl_ref[0]                                         # (TI, 1)
    margin = margin_ref[0].astype(jnp.float32)             # (TI, 1)
    mask = mask_ref[0].astype(jnp.float32)                 # (TI, 1)

    # probs_in_package[i, j] = golden_prob[j] * packages[i, j]; max over j.
    pip = gp_row * pkg                                     # (TI, T) sublane-broadcast
    max_pip = jnp.max(pip, axis=-1, keepdims=True)         # (TI, 1)

    # Detached bag weight; guard rows that belong to no package (max_pip == 0),
    # which would otherwise produce inf/NaN and poison the whole loss.
    gw = jnp.where(max_pip > 0.0,
                   gp * pl.reciprocal(max_pip, approx=True), 0.0)
    if ALPHA != 1:
        gw = gw ** ALPHA

    loss = gw * (gl + margin) + (1.0 - gw) * nl            # (TI, 1)
    num = jnp.sum(loss * mask)
    den = jnp.sum(mask)

    # Lane-dense (8,128) partial tile: [0,0]=numerator, [0,1]=denominator.
    row = jax.lax.broadcasted_iota(jnp.int32, (8, 128), 0)
    col = jax.lax.broadcasted_iota(jnp.int32, (8, 128), 1)
    out_ref[0, 0] = jnp.where((row == 0) & (col == 0), num,
                              jnp.where((row == 0) & (col == 1), den, 0.0))


# --------------------------------------------------------------------------- #
# Wrapper                                                                      #
# --------------------------------------------------------------------------- #
def bag_loss_with_margin(y_pred, targets, packages, margin_loss, seq_mask,
                         weight=None):
    B, T, C = y_pred.shape
    if weight is None:
        weight = jnp.ones((C,), jnp.float32)
    weight2d = jnp.asarray(weight, jnp.float32).reshape(1, C)

    # Inputs keep their native dtypes (kernels upcast per tile); only a
    # metadata reshape to (B, T, 1) so trailing block dims satisfy TPU tiling.
    targets3 = jnp.asarray(targets, jnp.int32).reshape(B, T, 1)
    margin3 = margin_loss.reshape(B, T, 1)
    mask3 = seq_mask.reshape(B, T, 1)

    # ---- Kernel 1: per-token CE pieces ------------------------------------
    TR = _round_tile(T, C * y_pred.dtype.itemsize, budget_bytes=1 << 20, cap=512)
    n_tr = pl.cdiv(T, TR)
    tok_spec = pl.BlockSpec((1, TR, 1), lambda b, r: (b, r, 0))
    gp, gl, nl = pl.pallas_call(
        _token_kernel,
        grid=(B, n_tr),
        in_specs=[
            pl.BlockSpec((1, TR, C), lambda b, r: (b, r, 0)),   # y_pred
            tok_spec,                                           # targets
            pl.BlockSpec((1, C), lambda b, r: (0, 0)),          # class weights
        ],
        out_specs=(tok_spec, tok_spec, tok_spec),
        out_shape=(
            jax.ShapeDtypeStruct((B, T, 1), jnp.float32),       # golden_prob
            jax.ShapeDtypeStruct((B, T, 1), jnp.float32),       # golden_loss
            jax.ShapeDtypeStruct((B, T, 1), jnp.float32),       # nil_loss
        ),
        compiler_params=pltpu.CompilerParams(
            dimension_semantics=("parallel", "parallel")),
    )(y_pred, targets3, weight2d)

    # golden probs of all tokens laid out along lanes (free reshape in HBM).
    gp_row = gp.reshape(B, 1, T)

    # ---- Kernel 2: bag-weighted loss streaming `packages` -----------------
    pkg_itemsize = packages.dtype.itemsize
    TI = _round_tile(T, T * pkg_itemsize, budget_bytes=4 << 20, cap=512)
    n_ti = pl.cdiv(T, TI)

    lane_pad = lambda n: ((n + 127) // 128) * 128
    need = 2 * (TI * lane_pad(T) * pkg_itemsize    # packages tile, double-buffered
                + lane_pad(T) * 4                  # gp_row (resident per batch)
                + 5 * TI * 128 * 4                 # gp/gl/nl/margin/mask tiles
                + 8 * 128 * 4)                     # partial output tile
    vmem_limit = int(min(100 * 2 ** 20, max(2 * need, 8 * 2 ** 20)))

    blk_spec = pl.BlockSpec((1, TI, 1), lambda b, i: (b, i, 0))
    partials = pl.pallas_call(
        _bag_kernel,
        grid=(B, n_ti),
        in_specs=[
            pl.BlockSpec((1, 1, T), lambda b, i: (b, 0, 0)),    # gp_row (per-batch resident)
            pl.BlockSpec((1, TI, T), lambda b, i: (b, i, 0)),   # packages (dominant stream)
            blk_spec,                                           # golden_prob rows
            blk_spec,                                           # golden_loss rows
            blk_spec,                                           # nil_loss rows
            blk_spec,                                           # margin rows
            blk_spec,                                           # seq_mask rows
        ],
        out_specs=pl.BlockSpec((1, 1, 8, 128), lambda b, i: (b, i, 0, 0)),
        out_shape=jax.ShapeDtypeStruct((B, n_ti, 8, 128), jnp.float32),
        compiler_params=pltpu.CompilerParams(
            dimension_semantics=("parallel", "parallel"),
            vmem_limit_bytes=vmem_limit),
    )(gp_row, packages, gp, gl, nl, margin3, mask3)

    num = jnp.sum(partials[:, :, 0, 0])
    den = jnp.sum(partials[:, :, 0, 1])
    return num / (den + EPSILON)


# --------------------------------------------------------------------------- #
# Pure-JAX reference mirroring the PyTorch forward                             #
# --------------------------------------------------------------------------- #
def bag_loss_ref(y_pred, targets, packages, margin_loss, seq_mask, weight=None):
    B, T, C = y_pred.shape
    if weight is None:
        weight = jnp.ones((C,), jnp.float32)
    log_probs = jax.nn.log_softmax(y_pred.astype(jnp.float32), axis=2)
    probs = jnp.exp(log_probs)
    gp = jnp.take_along_axis(probs, targets[..., None], axis=2)[..., 0]
    pip = gp[:, None, :] * packages.astype(jnp.float32)
    max_pip = jnp.max(pip, axis=2)
    gw = gp / max_pip
    g_logp = jnp.take_along_axis(log_probs, targets[..., None], axis=2)[..., 0]
    gl = -weight[targets] * g_logp
    nl = -weight[NIL_INDEX] * log_probs[:, :, NIL_INDEX]
    loss = (gw ** ALPHA) * (gl + margin_loss) + (1.0 - gw ** ALPHA) * nl
    return jnp.sum(loss * seq_mask) / (jnp.sum(seq_mask) + EPSILON)


if __name__ == "__main__":
    B, T, C = 2, 8, 16
    key = jax.random.PRNGKey(0)
    k1, k2, k3, k4 = jax.random.split(key, 4)

    y_pred = jax.random.normal(k1, (B, T, C), jnp.float32)
    targets = jax.random.randint(k2, (B, T), 0, C).astype(jnp.int32)
    # Two packages of 4 tokens each (block-diagonal membership mask), passed as
    # int8: the packages stream dominates HBM traffic, so the narrow dtype
    # quarters memory-bound cost; the kernel upcasts per tile.
    pkg_block = jnp.kron(jnp.eye(2, dtype=jnp.float32),
                         jnp.ones((4, 4), jnp.float32))            # (T, T)
    packages = jnp.broadcast_to(pkg_block, (B, T, T)).astype(jnp.int8)
    margin_loss = jax.random.uniform(k3, (B, T), jnp.float32) * 0.1
    seq_mask = jnp.ones((B, T), jnp.float32).at[:, -2:].set(0.0)
    weight = 0.5 + jax.random.uniform(k4, (C,), jnp.float32)        # class weights

    loss_fn = jax.jit(bag_loss_with_margin)
    loss = loss_fn(y_pred, targets, packages, margin_loss, seq_mask, weight)
    jax.block_until_ready(loss)

    ref = bag_loss_ref(y_pred, targets, packages, margin_loss, seq_mask, weight)
    np.testing.assert_allclose(np.asarray(loss), np.asarray(ref),
                               rtol=5e-3, atol=1e-5)
    print("KERNEL_OK")
</pallas_src>

<mosaic_0001>
module attributes {stable_mosaic.version = 11 : i64} {
  func.func @_token_kernel(%arg0: i32, %arg1: i32, %arg2: memref<1x8x16xf32, #tpu.memory_space<vmem>>, %arg3: memref<1x8x1xi32, #tpu.memory_space<vmem>>, %arg4: memref<1x16xf32, #tpu.memory_space<vmem>>, %arg5: memref<1x8x1xf32, #tpu.memory_space<vmem>>, %arg6: memref<1x8x1xf32, #tpu.memory_space<vmem>>, %arg7: memref<1x8x1xf32, #tpu.memory_space<vmem>>) attributes {dimension_semantics = [#tpu.dimension_semantics<parallel>, #tpu.dimension_semantics<parallel>], iteration_bounds = array<i64: 2, 1>, scalar_prefetch = 0 : i64, scratch_operands = 0 : i64, tpu.core_type = #tpu.core_type<tc>, window_params = [{transform_indices = @transform_0, window_bounds = array<i64: 1, 8, 16>}, {transform_indices = @transform_1, window_bounds = array<i64: 1, 8, 1>}, {pipeline_mode = #tpu.pipeline_mode<synchronous>, transform_indices = @transform_2, window_bounds = array<i64: 1, 16>}, {transform_indices = @transform_3, window_bounds = array<i64: 1, 8, 1>}, {transform_indices = @transform_4, window_bounds = array<i64: 1, 8, 1>}, {transform_indices = @transform_5, window_bounds = array<i64: 1, 8, 1>}]} {
    %c0 = arith.constant 0 : index
    %c0_0 = arith.constant 0 : index
    %c0_1 = arith.constant 0 : index
    %0 = vector.load %arg2[%c0, %c0_0, %c0_1] : memref<1x8x16xf32, #tpu.memory_space<vmem>>, vector<1x8x16xf32>
    %1 = vector.shape_cast %0 : vector<1x8x16xf32> to vector<8x16xf32>
    %c0_2 = arith.constant 0 : index
    %c0_3 = arith.constant 0 : index
    %c0_4 = arith.constant 0 : index
    %2 = vector.load %arg3[%c0_2, %c0_3, %c0_4] : memref<1x8x1xi32, #tpu.memory_space<vmem>>, vector<1x8x1xi32>
    %3 = vector.shape_cast %2 : vector<1x8x1xi32> to vector<8x1xi32>
    %c0_5 = arith.constant 0 : index
    %c0_6 = arith.constant 0 : index
    %4 = vector.load %arg4[%c0_5, %c0_6] : memref<1x16xf32, #tpu.memory_space<vmem>>, vector<1x16xf32>
    %cst = arith.constant dense<0xFF800000> : vector<8xf32>
    %5 = vector.multi_reduction <maximumf>, %1, %cst [1] : vector<8x16xf32> to vector<8xf32>
    %6 = vector.shape_cast %5 : vector<8xf32> to vector<8x1xf32>
    %7 = vector.broadcast %6 : vector<8x1xf32> to vector<8x16xf32>
    %8 = arith.subf %1, %7 : vector<8x16xf32>
    %9 = math.exp %8 : vector<8x16xf32>
    %cst_7 = arith.constant dense<0.000000e+00> : vector<8xf32>
    %10 = vector.multi_reduction <add>, %9, %cst_7 [1] : vector<8x16xf32> to vector<8xf32>
    %11 = vector.shape_cast %10 : vector<8xf32> to vector<8x1xf32>
    %12 = math.log %11 : vector<8x1xf32>
    %13 = vector.broadcast %12 : vector<8x1xf32> to vector<8x16xf32>
    %14 = arith.subf %8, %13 : vector<8x16xf32>
    %15 = tpu.iota {dimensions = array<i32: 1>} : vector<8x16xi32>
    %16 = vector.broadcast %3 : vector<8x1xi32> to vector<8x16xi32>
    %17 = arith.cmpi eq, %15, %16 : vector<8x16xi32>
    %cst_8 = arith.constant 0.000000e+00 : f32
    %18 = vector.broadcast %cst_8 : f32 to vector<8x16xf32>
    %19 = arith.select %17, %14, %18 : vector<8x16xi1>, vector<8x16xf32>
    %cst_9 = arith.constant dense<0.000000e+00> : vector<8xf32>
    %20 = vector.multi_reduction <add>, %19, %cst_9 [1] : vector<8x16xf32> to vector<8xf32>
    %21 = vector.shape_cast %20 : vector<8xf32> to vector<8x1xf32>
    %cst_10 = arith.constant 0.000000e+00 : f32
    %22 = vector.shape_cast %4 : vector<1x16xf32> to vector<1x16xf32>
    %23 = vector.broadcast %22 : vector<1x16xf32> to vector<8x16xf32>
    %24 = vector.broadcast %cst_10 : f32 to vector<8x16xf32>
    %25 = arith.select %17, %23, %24 : vector<8x16xi1>, vector<8x16xf32>
    %cst_11 = arith.constant dense<0.000000e+00> : vector<8xf32>
    %26 = vector.multi_reduction <add>, %25, %cst_11 [1] : vector<8x16xf32> to vector<8xf32>
    %27 = vector.shape_cast %26 : vector<8xf32> to vector<8x1xf32>
    %28 = vector.extract_strided_slice %14 {offsets = [0, 0], sizes = [8, 1], strides = [1, 1]} : vector<8x16xf32> to vector<8x1xf32>
    %29 = vector.extract_strided_slice %4 {offsets = [0, 0], sizes = [1, 1], strides = [1, 1]} : vector<1x16xf32> to vector<1x1xf32>
    %30 = math.exp %21 : vector<8x1xf32>
    %c0_12 = arith.constant 0 : index
    %c0_13 = arith.constant 0 : index
    %c0_14 = arith.constant 0 : index
    %31 = vector.load %arg5[%c0_12, %c0_13, %c0_14] : memref<1x8x1xf32, #tpu.memory_space<vmem>>, vector<1x8x1xf32>
    %32 = vector.shape_cast %31 : vector<1x8x1xf32> to vector<8x1xf32>
    %33 = vector.shape_cast %30 : vector<8x1xf32> to vector<1x8x1xf32>
    tpu.vector_store %arg5[%c0_12, %c0_13, %c0_14], %33 {strides = array<i32>} : memref<1x8x1xf32, #tpu.memory_space<vmem>>, vector<1x8x1xf32>,
    %cst_15 = arith.constant 0.000000e+00 : f32
    %34 = vector.broadcast %cst_15 : f32 to vector<8x1xf32>
    %35 = arith.subf %34, %27 : vector<8x1xf32>
    %36 = arith.mulf %35, %21 : vector<8x1xf32>
    %c0_16 = arith.constant 0 : index
    %c0_17 = arith.constant 0 : index
    %c0_18 = arith.constant 0 : index
    %37 = vector.load %arg6[%c0_16, %c0_17, %c0_18] : memref<1x8x1xf32, #tpu.memory_space<vmem>>, vector<1x8x1xf32>
    %38 = vector.shape_cast %37 : vector<1x8x1xf32> to vector<8x1xf32>
    %39 = vector.shape_cast %36 : vector<8x1xf32> to vector<1x8x1xf32>
    tpu.vector_store %arg6[%c0_16, %c0_17, %c0_18], %39 {strides = array<i32>} : memref<1x8x1xf32, #tpu.memory_space<vmem>>, vector<1x8x1xf32>,
    %cst_19 = arith.constant 0.000000e+00 : f32
    %40 = vector.broadcast %cst_19 : f32 to vector<1x1xf32>
    %41 = arith.subf %40, %29 : vector<1x1xf32>
    %42 = vector.broadcast %41 : vector<1x1xf32> to vector<8x1xf32>
    %43 = arith.mulf %42, %28 : vector<8x1xf32>
    %c0_20 = arith.constant 0 : index
    %c0_21 = arith.constant 0 : index
    %c0_22 = arith.constant 0 : index
    %44 = vector.load %arg7[%c0_20, %c0_21, %c0_22] : memref<1x8x1xf32, #tpu.memory_space<vmem>>, vector<1x8x1xf32>
    %45 = vector.shape_cast %44 : vector<1x8x1xf32> to vector<8x1xf32>
    %46 = vector.shape_cast %43 : vector<8x1xf32> to vector<1x8x1xf32>
    tpu.vector_store %arg7[%c0_20, %c0_21, %c0_22], %46 {strides = array<i32>} : memref<1x8x1xf32, #tpu.memory_space<vmem>>, vector<1x8x1xf32>,
    return
  }
  func.func @transform_0(%arg0: i32, %arg1: i32) -> (i32, i32, i32) {
    %c0_i32 = arith.constant 0 : i32
    %c0_i32_0 = arith.constant 0 : i32
    return %arg0, %arg1, %c0_i32 : i32, i32, i32
  }
  func.func @transform_1(%arg0: i32, %arg1: i32) -> (i32, i32, i32) {
    %c0_i32 = arith.constant 0 : i32
    %c0_i32_0 = arith.constant 0 : i32
    return %arg0, %arg1, %c0_i32 : i32, i32, i32
  }
  func.func @transform_2(%arg0: i32, %arg1: i32) -> (i32, i32) {
    %c0_i32 = arith.constant 0 : i32
    %c0_i32_0 = arith.constant 0 : i32
    %c0_i32_1 = arith.constant 0 : i32
    return %c0_i32, %c0_i32_0 : i32, i32
  }
  func.func @transform_3(%arg0: i32, %arg1: i32) -> (i32, i32, i32) {
    %c0_i32 = arith.constant 0 : i32
    %c0_i32_0 = arith.constant 0 : i32
    return %arg0, %arg1, %c0_i32 : i32, i32, i32
  }
  func.func @transform_4(%arg0: i32, %arg1: i32) -> (i32, i32, i32) {
    %c0_i32 = arith.constant 0 : i32
    %c0_i32_0 = arith.constant 0 : i32
    return %arg0, %arg1, %c0_i32 : i32, i32, i32
  }
  func.func @transform_5(%arg0: i32, %arg1: i32) -> (i32, i32, i32) {
    %c0_i32 = arith.constant 0 : i32
    %c0_i32_0 = arith.constant 0 : i32
    return %arg0, %arg1, %c0_i32 : i32, i32, i32
  }
}

module attributes {stable_mosaic.version = 11 : i64} {
  func.func @_bag_kernel(%arg0: i32, %arg1: i32, %arg2: memref<1x1x8xf32, #tpu.memory_space<vmem>>, %arg3: memref<1x8x8xi8, #tpu.memory_space<vmem>>, %arg4: memref<1x8x1xf32, #tpu.memory_space<vmem>>, %arg5: memref<1x8x1xf32, #tpu.memory_space<vmem>>, %arg6: memref<1x8x1xf32, #tpu.memory_space<vmem>>, %arg7: memref<1x8x1xf32, #tpu.memory_space<vmem>>, %arg8: memref<1x8x1xf32, #tpu.memory_space<vmem>>, %arg9: memref<1x1x8x128xf32, #tpu.memory_space<vmem>>) attributes {dimension_semantics = [#tpu.dimension_semantics<parallel>, #tpu.dimension_semantics<parallel>], iteration_bounds = array<i64: 2, 1>, scalar_prefetch = 0 : i64, scratch_operands = 0 : i64, tpu.core_type = #tpu.core_type<tc>, window_params = [{transform_indices = @transform_0, window_bounds = array<i64: 1, 1, 8>}, {transform_indices = @transform_1, window_bounds = array<i64: 1, 8, 8>}, {transform_indices = @transform_2, window_bounds = array<i64: 1, 8, 1>}, {transform_indices = @transform_3, window_bounds = array<i64: 1, 8, 1>}, {transform_indices = @transform_4, window_bounds = array<i64: 1, 8, 1>}, {transform_indices = @transform_5, window_bounds = array<i64: 1, 8, 1>}, {transform_indices = @transform_6, window_bounds = array<i64: 1, 8, 1>}, {transform_indices = @transform_7, window_bounds = array<i64: 1, 1, 8, 128>}]} {
    %c0 = arith.constant 0 : index
    %c0_0 = arith.constant 0 : index
    %c0_1 = arith.constant 0 : index
    %0 = vector.load %arg2[%c0, %c0_0, %c0_1] : memref<1x1x8xf32, #tpu.memory_space<vmem>>, vector<1x1x8xf32>
    %1 = vector.shape_cast %0 : vector<1x1x8xf32> to vector<1x8xf32>
    %c0_2 = arith.constant 0 : index
    %c0_3 = arith.constant 0 : index
    %c0_4 = arith.constant 0 : index
    %2 = vector.load %arg3[%c0_2, %c0_3, %c0_4] : memref<1x8x8xi8, #tpu.memory_space<vmem>>, vector<1x8x8xi8>
    %3 = vector.shape_cast %2 : vector<1x8x8xi8> to vector<8x8xi8>
    %4 = arith.sitofp %3 : vector<8x8xi8> to vector<8x8xf32>
    %c0_5 = arith.constant 0 : index
    %c0_6 = arith.constant 0 : index
    %c0_7 = arith.constant 0 : index
    %5 = vector.load %arg4[%c0_5, %c0_6, %c0_7] : memref<1x8x1xf32, #tpu.memory_space<vmem>>, vector<1x8x1xf32>
    %6 = vector.shape_cast %5 : vector<1x8x1xf32> to vector<8x1xf32>
    %c0_8 = arith.constant 0 : index
    %c0_9 = arith.constant 0 : index
    %c0_10 = arith.constant 0 : index
    %7 = vector.load %arg5[%c0_8, %c0_9, %c0_10] : memref<1x8x1xf32, #tpu.memory_space<vmem>>, vector<1x8x1xf32>
    %8 = vector.shape_cast %7 : vector<1x8x1xf32> to vector<8x1xf32>
    %c0_11 = arith.constant 0 : index
    %c0_12 = arith.constant 0 : index
    %c0_13 = arith.constant 0 : index
    %9 = vector.load %arg6[%c0_11, %c0_12, %c0_13] : memref<1x8x1xf32, #tpu.memory_space<vmem>>, vector<1x8x1xf32>
    %10 = vector.shape_cast %9 : vector<1x8x1xf32> to vector<8x1xf32>
    %c0_14 = arith.constant 0 : index
    %c0_15 = arith.constant 0 : index
    %c0_16 = arith.constant 0 : index
    %11 = vector.load %arg7[%c0_14, %c0_15, %c0_16] : memref<1x8x1xf32, #tpu.memory_space<vmem>>, vector<1x8x1xf32>
    %12 = vector.shape_cast %11 : vector<1x8x1xf32> to vector<8x1xf32>
    %c0_17 = arith.constant 0 : index
    %c0_18 = arith.constant 0 : index
    %c0_19 = arith.constant 0 : index
    %13 = vector.load %arg8[%c0_17, %c0_18, %c0_19] : memref<1x8x1xf32, #tpu.memory_space<vmem>>, vector<1x8x1xf32>
    %14 = vector.shape_cast %13 : vector<1x8x1xf32> to vector<8x1xf32>
    %15 = vector.broadcast %1 : vector<1x8xf32> to vector<8x8xf32>
    %16 = arith.mulf %15, %4 : vector<8x8xf32>
    %cst = arith.constant dense<0xFF800000> : vector<8xf32>
    %17 = vector.multi_reduction <maximumf>, %16, %cst [1] : vector<8x8xf32> to vector<8xf32>
    %18 = vector.shape_cast %17 : vector<8xf32> to vector<8x1xf32>
    %cst_20 = arith.constant 0.000000e+00 : f32
    %19 = vector.broadcast %cst_20 : f32 to vector<8x1xf32>
    %20 = arith.cmpf ogt, %18, %19 : vector<8x1xf32>
    %21 = tpu.reciprocal %18 {approx = true} : vector<8x1xf32> -> vector<8x1xf32>
    %22 = arith.mulf %6, %21 : vector<8x1xf32>
    %cst_21 = arith.constant 0.000000e+00 : f32
    %23 = vector.broadcast %cst_21 : f32 to vector<8x1xf32>
    %24 = arith.select %20, %22, %23 : vector<8x1xi1>, vector<8x1xf32>
    %25 = arith.addf %8, %12 : vector<8x1xf32>
    %26 = arith.mulf %24, %25 : vector<8x1xf32>
    %cst_22 = arith.constant 1.000000e+00 : f32
    %27 = vector.broadcast %cst_22 : f32 to vector<8x1xf32>
    %28 = arith.subf %27, %24 : vector<8x1xf32>
    %29 = arith.mulf %28, %10 : vector<8x1xf32>
    %30 = arith.addf %26, %29 : vector<8x1xf32>
    %31 = arith.mulf %30, %14 : vector<8x1xf32>
    %32 = vector.shape_cast %31 : vector<8x1xf32> to vector<1x8x1xf32>
    %cst_23 = arith.constant dense<0.000000e+00> : vector<1xf32>
    %33 = vector.multi_reduction <add>, %32, %cst_23 [1, 2] : vector<1x8x1xf32> to vector<1xf32>
    %34 = vector.shape_cast %33 : vector<1xf32> to vector<1x1x1xf32>
    %35 = vector.extract %34[0, 0, 0] : f32 from vector<1x1x1xf32>
    %36 = vector.shape_cast %14 : vector<8x1xf32> to vector<1x8x1xf32>
    %cst_24 = arith.constant dense<0.000000e+00> : vector<1xf32>
    %37 = vector.multi_reduction <add>, %36, %cst_24 [1, 2] : vector<1x8x1xf32> to vector<1xf32>
    %38 = vector.shape_cast %37 : vector<1xf32> to vector<1x1x1xf32>
    %39 = vector.extract %38[0, 0, 0] : f32 from vector<1x1x1xf32>
    %40 = tpu.iota {dimensions = array<i32: 0>} : vector<8x128xi32>
    %41 = tpu.iota {dimensions = array<i32: 1>} : vector<8x128xi32>
    %c0_i32 = arith.constant 0 : i32
    %42 = vector.broadcast %c0_i32 : i32 to vector<8x128xi32>
    %43 = arith.cmpi eq, %40, %42 : vector<8x128xi32>
    %c0_i32_25 = arith.constant 0 : i32
    %44 = vector.broadcast %c0_i32_25 : i32 to vector<8x128xi32>
    %45 = arith.cmpi eq, %41, %44 : vector<8x128xi32>
    %46 = arith.andi %43, %45 : vector<8x128xi1>
    %c0_i32_26 = arith.constant 0 : i32
    %47 = vector.broadcast %c0_i32_26 : i32 to vector<8x128xi32>
    %48 = arith.cmpi eq, %40, %47 : vector<8x128xi32>
    %c1_i32 = arith.constant 1 : i32
    %49 = vector.broadcast %c1_i32 : i32 to vector<8x128xi32>
    %50 = arith.cmpi eq, %41, %49 : vector<8x128xi32>
    %51 = arith.andi %48, %50 : vector<8x128xi1>
    %cst_27 = arith.constant 0.000000e+00 : f32
    %52 = vector.broadcast %39 : f32 to vector<8x128xf32>
    %53 = vector.broadcast %cst_27 : f32 to vector<8x128xf32>
    %54 = arith.select %51, %52, %53 : vector<8x128xi1>, vector<8x128xf32>
    %55 = vector.broadcast %35 : f32 to vector<8x128xf32>
    %56 = arith.select %46, %55, %54 : vector<8x128xi1>, vector<8x128xf32>
    %c0_28 = arith.constant 0 : index
    %c0_29 = arith.constant 0 : index
    %c0_30 = arith.constant 0 : index
    %c0_31 = arith.constant 0 : index
    %57 = vector.load %arg9[%c0_28, %c0_29, %c0_30, %c0_31] : memref<1x1x8x128xf32, #tpu.memory_space<vmem>>, vector<1x1x8x128xf32>
    %58 = vector.shape_cast %57 : vector<1x1x8x128xf32> to vector<8x128xf32>
    %59 = vector.shape_cast %56 : vector<8x128xf32> to vector<1x1x8x128xf32>
    tpu.vector_store %arg9[%c0_28, %c0_29, %c0_30, %c0_31], %59 {strides = array<i32>} : memref<1x1x8x128xf32, #tpu.memory_space<vmem>>, vector<1x1x8x128xf32>,
    return
  }
  func.func @transform_0(%arg0: i32, %arg1: i32) -> (i32, i32, i32) {
    %c0_i32 = arith.constant 0 : i32
    %c0_i32_0 = arith.constant 0 : i32
    %c0_i32_1 = arith.constant 0 : i32
    return %arg0, %c0_i32, %c0_i32_0 : i32, i32, i32
  }
  func.func @transform_1(%arg0: i32, %arg1: i32) -> (i32, i32, i32) {
    %c0_i32 = arith.constant 0 : i32
    %c0_i32_0 = arith.constant 0 : i32
    return %arg0, %arg1, %c0_i32 : i32, i32, i32
  }
  func.func @transform_2(%arg0: i32, %arg1: i32) -> (i32, i32, i32) {
    %c0_i32 = arith.constant 0 : i32
    %c0_i32_0 = arith.constant 0 : i32
    return %arg0, %arg1, %c0_i32 : i32, i32, i32
  }
  func.func @transform_3(%arg0: i32, %arg1: i32) -> (i32, i32, i32) {
    %c0_i32 = arith.constant 0 : i32
    %c0_i32_0 = arith.constant 0 : i32
    return %arg0, %arg1, %c0_i32 : i32, i32, i32
  }
  func.func @transform_4(%arg0: i32, %arg1: i32) -> (i32, i32, i32) {
    %c0_i32 = arith.constant 0 : i32
    %c0_i32_0 = arith.constant 0 : i32
    return %arg0, %arg1, %c0_i32 : i32, i32, i32
  }
  func.func @transform_5(%arg0: i32, %arg1: i32) -> (i32, i32, i32) {
    %c0_i32 = arith.constant 0 : i32
    %c0_i32_0 = arith.constant 0 : i32
    return %arg0, %arg1, %c0_i32 : i32, i32, i32
  }
  func.func @transform_6(%arg0: i32, %arg1: i32) -> (i32, i32, i32) {
    %c0_i32 = arith.constant 0 : i32
    %c0_i32_0 = arith.constant 0 : i32
    return %arg0, %arg1, %c0_i32 : i32, i32, i32
  }
  func.func @transform_7(%arg0: i32, %arg1: i32) -> (i32, i32, i32, i32) {
    %c0_i32 = arith.constant 0 : i32
    %c0_i32_0 = arith.constant 0 : i32
    %c0_i32_1 = arith.constant 0 : i32
    return %arg0, %arg1, %c0_i32, %c0_i32_0 : i32, i32, i32, i32
  }
}

</mosaic_0001>

<llo_original>
// kernel: bag_loss_with_margin.2
$region0: #{bag_loss_with_margin.2}
  #allocation0 [shape = 'u32[]', space=smem, size = 0x4, offset = 0x4, fixed_abs, tag = 'smem constant byte address 0x4 - core index']
  #allocation1 [shape = 'u32[144,128]{1,0:T(1,128)}', space=vmem, size = 0x12000, scoped, tag = 'internal scratch']
  %s0 = inlined_call_operand.vmem [shape: f32[2,8,16], index: 0, kind: input, shape index: {}]
  %s1 = inlined_call_operand.vmem [shape: s32[2,8,1], index: 1, kind: input, shape index: {}]
  %s2 = inlined_call_operand.vmem [shape: f32[1,16], index: 2, kind: input, shape index: {}]
  %s3 = inlined_call_operand.vmem [shape: f32[2,8,1], index: 3, kind: output, shape index: {0}]
  %s4 = inlined_call_operand.vmem [shape: f32[2,8,1], index: 4, kind: output, shape index: {1}]
  %s5 = inlined_call_operand.vmem [shape: f32[2,8,1], index: 5, kind: output, shape index: {2}]
  %6 = xla_tuple %s3, %s4, %s5
  %s7 = sld [smem:[#allocation0]]
  $region61: #{bag_loss_with_margin.2} parent=0
    _
  %s9 = ssub.s32 1, %s7
  %s10 = scalar_select 0, %s9, %s7
  loop: start=0, step=1, limit=4
  $region2: #{bag_loss_with_margin.2} parent=0 // loop_pre_header
    _
  $region3: #{bag_loss_with_margin.2} parent=0 // loop_header
    %s12 = sphi 0, %s16
    %p13 = scmp.ge.s32.totalorder %s12, 4
    %s19 = sphi 0, %s31
    %s20 = sphi 0, %s27
    %s21 = sphi 0, %s19
    %s22 = sphi 0, %s20
    %s23 = sphi 0, %s21
    %s24 = sphi 0, %s22
    %s36 = sphi 0, %s38
    %s39 = sphi 0, %s36
    %s40 = sphi 0, %s39
    %s56 = sphi 0, %s40
    %s64 = sphi 0, %s66
    %s67 = sphi 0, %s64
    %s68 = sphi 0, %s67
    %s84 = sphi 0, %s68
    %s88 = sphi 0, %s88
    %s90 = sphi 0, %s88
    %s91 = sphi 0, %s90
    %s105 = sphi 0, %s91
    %s113 = sphi 0, %s115
    %s116 = sphi 0, %s113
    %s117 = sphi 0, %s116
    %s133 = sphi 0, %s117
    %s141 = sphi 0, %s143
    %s144 = sphi 0, %s141
    %s145 = sphi 0, %s144
    %s161 = sphi 0, %s145
    %s169 = sphi 0, %s171
    %s172 = sphi 0, %s169
    %s173 = sphi 0, %s172
    %s189 = sphi 0, %s173
  $region4: #{bag_loss_with_margin.2} parent=0 // loop_header_branch
    %15 = sbr.rel (%p13) target = $region8
  $region5: #{bag_loss_with_margin.2} parent=0 // loop_body
    %s17 = ssub.s32 %s12, 1
    %s18 = ssub.s32 %s12, 2
    %s25 = sadd.s32 1, %s20
    %p26 = scmp.ge.s32.totalorder %s25, 1
    %s27 = scalar_select %p26, 0, %s25
    %s28 = sadd.s32 1, %s19
    %s29 = scalar_select %p26, %s28, %s19
    %p30 = scmp.ge.s32.totalorder %s29, 2
    %s31 = scalar_select %p30, 0, %s29
    %s32 = ssub.s32 %s19, %s31
    %s33 = ssub.s32 %s20, %s27
    %s34 = sor.u32 %s32, %s33
    %p35 = scmp.eq.s32.totalorder %s34, 0
    %s37 = sadd.s32 %s36, 1
    %s38 = scalar_select %p35, %s36, %s37
    %p41 = pneg %p35
    %p42 = scmp.eq.s32.totalorder %s12, 1
    %p43 = por %p41, %p42
    %p44 = scmp.ne.s32.totalorder %s36, %s39
    %p45 = scmp.eq.s32.totalorder %s12, 0
    %p46 = por %p44, %p45
    %p47 = scmp.ne.s32.totalorder %s36, %s39
    %p48 = scmp.eq.s32.totalorder %s17, 1
    %p49 = por %p47, %p48
    %p50 = scmp.ne.s32.totalorder %s39, %s40
    %p51 = scmp.eq.s32.totalorder %s17, 0
    %p52 = por %p50, %p51
    %p53 = scmp.ne.s32.totalorder %s39, %s40
    %p54 = scmp.eq.s32.totalorder %s18, 1
    %p55 = por %p53, %p54
    %p57 = scmp.ne.s32.totalorder %s40, %s56
    %p58 = scmp.eq.s32.totalorder %s18, 0
    %p59 = por %p57, %p58
    %s60 = ssub.s32 %s19, %s31
    %s61 = ssub.s32 %s20, %s27
    %s62 = sor.u32 %s60, %s61
    %p63 = scmp.eq.s32.totalorder %s62, 0
    %s65 = sadd.s32 %s64, 1
    %s66 = scalar_select %p63, %s64, %s65
    %p69 = pneg %p63
    %p70 = scmp.eq.s32.totalorder %s12, 1
    %p71 = por %p69, %p70
    %p72 = scmp.ne.s32.totalorder %s64, %s67
    %p73 = scmp.eq.s32.totalorder %s12, 0
    %p74 = por %p72, %p73
    %p75 = scmp.ne.s32.totalorder %s64, %s67
    %p76 = scmp.eq.s32.totalorder %s17, 1
    %p77 = por %p75, %p76
    %p78 = scmp.ne.s32.totalorder %s67, %s68
    %p79 = scmp.eq.s32.totalorder %s17, 0
    %p80 = por %p78, %p79
    %p81 = scmp.ne.s32.totalorder %s67, %s68
    %p82 = scmp.eq.s32.totalorder %s18, 1
    %p83 = por %p81, %p82
    %p85 = scmp.ne.s32.totalorder %s68, %s84
    %p86 = scmp.eq.s32.totalorder %s18, 0
    %p87 = por %p85, %p86
    %s89 = sadd.s32 %s88, 1
    %p92 = scmp.eq.s32.totalorder %s12, 1
    %p93 = scmp.ne.s32.totalorder %s88, %s90
    %p94 = scmp.eq.s32.totalorder %s12, 0
    %p95 = por %p93, %p94
    %p96 = scmp.ne.s32.totalorder %s88, %s90
    %p97 = scmp.eq.s32.totalorder %s17, 1
    %p98 = por %p96, %p97
    %p99 = scmp.ne.s32.totalorder %s90, %s91
    %p100 = scmp.eq.s32.totalorder %s17, 0
    %p101 = por %p99, %p100
    %p102 = scmp.ne.s32.totalorder %s90, %s91
    %p103 = scmp.eq.s32.totalorder %s18, 1
    %p104 = por %p102, %p103
    %p106 = scmp.ne.s32.totalorder %s91, %s105
    %p107 = scmp.eq.s32.totalorder %s18, 0
    %p108 = por %p106, %p107
    %s109 = ssub.s32 %s19, %s31
    %s110 = ssub.s32 %s20, %s27
    %s111 = sor.u32 %s109, %s110
    %p112 = scmp.eq.s32.totalorder %s111, 0
    %s114 = sadd.s32 %s113, 1
    %s115 = scalar_select %p112, %s113, %s114
    %p118 = pneg %p112
    %p119 = scmp.eq.s32.totalorder %s12, 1
    %p120 = por %p118, %p119
    %p121 = scmp.ne.s32.totalorder %s113, %s116
    %p122 = scmp.eq.s32.totalorder %s12, 0
    %p123 = por %p121, %p122
    %p124 = scmp.ne.s32.totalorder %s113, %s116
    %p125 = scmp.eq.s32.totalorder %s17, 1
    %p126 = por %p124, %p125
    %p127 = scmp.ne.s32.totalorder %s116, %s117
    %p128 = scmp.eq.s32.totalorder %s17, 0
    %p129 = por %p127, %p128
    %p130 = scmp.ne.s32.totalorder %s116, %s117
    %p131 = scmp.eq.s32.totalorder %s18, 1
    %p132 = por %p130, %p131
    %p134 = scmp.ne.s32.totalorder %s117, %s133
    %p135 = scmp.eq.s32.totalorder %s18, 0
    %p136 = por %p134, %p135
    %s137 = ssub.s32 %s19, %s31
    %s138 = ssub.s32 %s20, %s27
    %s139 = sor.u32 %s137, %s138
    %p140 = scmp.eq.s32.totalorder %s139, 0
    %s142 = sadd.s32 %s141, 1
    %s143 = scalar_select %p140, %s141, %s142
    %p146 = pneg %p140
    %p147 = scmp.eq.s32.totalorder %s12, 1
    %p148 = por %p146, %p147
    %p149 = scmp.ne.s32.totalorder %s141, %s144
    %p150 = scmp.eq.s32.totalorder %s12, 0
    %p151 = por %p149, %p150
    %p152 = scmp.ne.s32.totalorder %s141, %s144
    %p153 = scmp.eq.s32.totalorder %s17, 1
    %p154 = por %p152, %p153
    %p155 = scmp.ne.s32.totalorder %s144, %s145
    %p156 = scmp.eq.s32.totalorder %s17, 0
    %p157 = por %p155, %p156
    %p158 = scmp.ne.s32.totalorder %s144, %s145
    %p159 = scmp.eq.s32.totalorder %s18, 1
    %p160 = por %p158, %p159
    %p162 = scmp.ne.s32.totalorder %s145, %s161
    %p163 = scmp.eq.s32.totalorder %s18, 0
    %p164 = por %p162, %p163
    %s165 = ssub.s32 %s19, %s31
    %s166 = ssub.s32 %s20, %s27
    %s167 = sor.u32 %s165, %s166
    %p168 = scmp.eq.s32.totalorder %s167, 0
    %s170 = sadd.s32 %s169, 1
    %s171 = scalar_select %p168, %s169, %s170
    %p174 = pneg %p168
    %p175 = scmp.eq.s32.totalorder %s12, 1
    %p176 = por %p174, %p175
    %p177 = scmp.ne.s32.totalorder %s169, %s172
    %p178 = scmp.eq.s32.totalorder %s12, 0
    %p179 = por %p177, %p178
    %p180 = scmp.ne.s32.totalorder %s169, %s172
    %p181 = scmp.eq.s32.totalorder %s17, 1
    %p182 = por %p180, %p181
    %p183 = scmp.ne.s32.totalorder %s172, %s173
    %p184 = scmp.eq.s32.totalorder %s17, 0
    %p185 = por %p183, %p184
    %p186 = scmp.ne.s32.totalorder %s172, %s173
    %p187 = scmp.eq.s32.totalorder %s18, 1
    %p188 = por %p186, %p187
    %p190 = scmp.ne.s32.totalorder %s173, %s189
    %p191 = scmp.eq.s32.totalorder %s18, 0
    %p192 = por %p190, %p191
    %p193 = scmp.le.s32.totalorder 1, %s12
    %p194 = scmp.lt.s32.totalorder %s12, 3
    %p195 = pnand %p193, %p194
    %p196 = pneg %p195
    // Predicated region
    $region9: #{bag_loss_with_margin.2} parent=5 // pred_check
      _
    $region10: #{bag_loss_with_margin.2} parent=5 // pred_check_branch
      %198 = sbr.rel (%p195) target = $region12
    $region11: #{bag_loss_with_margin.2} parent=5 // pred_region
      %s199 = ssub.s32 %s12, 1
      // Predicated region
      $region13: #{bag_loss_with_margin.2} parent=11 // pred_check
        %p200 = pneg %p101
      $region14: #{bag_loss_with_margin.2} parent=11 // pred_check_branch
        %202 = sbr.rel (%p200) target = $region16
      $region15: #{bag_loss_with_margin.2} parent=11 // pred_region
        _
      $region16: #{bag_loss_with_margin.2} parent=11 // pred_fallthru
        _
    $region12: #{bag_loss_with_margin.2} parent=5 // pred_fallthru
      _
    %p203 = scmp.lt.s32.totalorder %s12, 2
    // Predicated region
    $region17: #{bag_loss_with_margin.2} parent=5 // pred_check
      %p204 = pneg %p203
    $region18: #{bag_loss_with_margin.2} parent=5 // pred_check_branch
      %206 = sbr.rel (%p204) target = $region20
    $region19: #{bag_loss_with_margin.2} parent=5 // pred_region
      // Predicated region
      $region21: #{bag_loss_with_margin.2} parent=19 // pred_check
        %p207 = pneg %p46
      $region22: #{bag_loss_with_margin.2} parent=19 // pred_check_branch
        %209 = sbr.rel (%p207) target = $region24
      $region23: #{bag_loss_with_margin.2} parent=19 // pred_region
        %p210 = scmp.lt.s32.totalorder %s19, 1
        %s211 = scalar_select %p210, %s19, 1
        %p212 = scmp.lt.s32.totalorder %s20, 0
        %s213 = scalar_select %p212, %s20, 0
        %s214 = sadd.s32 %s213, %s211
        %s215 = smul.addr %s214, 8
        %s216 = scalar_lea.vmem %s0, %s215
      $region24: #{bag_loss_with_margin.2} parent=19 // pred_fallthru
        _
      // Predicated region
      $region25: #{bag_loss_with_margin.2} parent=19 // pred_check
        %p217 = pneg %p74
      $region26: #{bag_loss_with_margin.2} parent=19 // pred_check_branch
        %219 = sbr.rel (%p217) target = $region28
      $region27: #{bag_loss_with_margin.2} parent=19 // pred_region
        %p220 = scmp.lt.s32.totalorder %s19, 1
        %s221 = scalar_select %p220, %s19, 1
        %p222 = scmp.lt.s32.totalorder %s20, 0
        %s223 = scalar_select %p222, %s20, 0
        %s224 = sadd.s32 %s223, %s221
        %s225 = smul.addr %s224, 8
        %s226 = scalar_lea.vmem %s1, %s225
      $region28: #{bag_loss_with_margin.2} parent=19 // pred_fallthru
        _
    $region20: #{bag_loss_with_margin.2} parent=5 // pred_fallthru
      _
    %p227 = scmp.le.s32.totalorder 1, %s12
    %p228 = scmp.lt.s32.totalorder %s12, 3
    %p229 = pnand %p227, %p228
    %p230 = pneg %p229
    // Predicated region
    $region29: #{bag_loss_with_margin.2} parent=5 // pred_check
      _
    $region30: #{bag_loss_with_margin.2} parent=5 // pred_check_branch
      %232 = sbr.rel (%p229) target = $region32
    $region31: #{bag_loss_with_margin.2} parent=5 // pred_region
      %s233 = ssub.s32 %s12, 1
      %p234 = scmp.lt.s32.totalorder %s21, 1
      %s235 = scalar_select %p234, %s21, 1
      %p236 = scmp.lt.s32.totalorder %s22, 0
      %s237 = scalar_select %p236, %s22, 0
      %s238 = sadd.s32 %s237, %s235
      %s239 = smul.addr %s238, 8
      %s240 = scalar_lea.vmem %s0, %s239
      %p241 = pneg %p52
      %p242 = pneg %p49
      %p243 = scmp.lt.s32.totalorder %s21, 1
      %s244 = scalar_select %p243, %s21, 1
      %p245 = scmp.lt.s32.totalorder %s22, 0
      %s246 = scalar_select %p245, %s22, 0
      %s247 = sadd.s32 %s246, %s244
      %s248 = smul.addr %s247, 8
      %s249 = scalar_lea.vmem %s1, %s248
      %p250 = pneg %p80
      %p251 = pneg %p77
      %p252 = pneg %p101
      %p253 = pneg %p98
      %p254 = pneg %p129
      %p255 = pneg %p126
      %p256 = scmp.lt.s32.totalorder %s21, 1
      %s257 = scalar_select %p256, %s21, 1
      %p258 = scmp.lt.s32.totalorder %s22, 0
      %s259 = scalar_select %p258, %s22, 0
      %s260 = sadd.s32 %s259, %s257
      %s261 = smul.addr %s260, 8
      %s262 = scalar_lea.vmem %s3, %s261
      %p263 = pneg %p157
      %p264 = pneg %p154
      %p265 = scmp.lt.s32.totalorder %s21, 1
      %s266 = scalar_select %p265, %s21, 1
      %p267 = scmp.lt.s32.totalorder %s22, 0
      %s268 = scalar_select %p267, %s22, 0
      %s269 = sadd.s32 %s268, %s266
      %s270 = smul.addr %s269, 8
      %s271 = scalar_lea.vmem %s4, %s270
      %p272 = pneg %p185
      %p273 = pneg %p182
      %p274 = scmp.lt.s32.totalorder %s21, 1
      %s275 = scalar_select %p274, %s21, 1
      %p276 = scmp.lt.s32.totalorder %s22, 0
      %s277 = scalar_select %p276, %s22, 0
      %s278 = sadd.s32 %s277, %s275
      %s279 = smul.addr %s278, 8
      %s280 = scalar_lea.vmem %s5, %s279
      %p281 = scmp.lt.s32.totalorder %s21, 1
      %s282 = scalar_select %p281, %s21, 1
      %p283 = scmp.lt.s32.totalorder %s22, 0
      %s284 = scalar_select %p283, %s22, 0
      %s285 = sadd.s32 %s284, %s282
      %s286 = smul.addr %s285, 8
      %s287 = scalar_lea.vmem %s0, %s286
      %p288 = scmp.lt.s32.totalorder %s21, 1
      %s289 = scalar_select %p288, %s21, 1
      %p290 = scmp.lt.s32.totalorder %s22, 0
      %s291 = scalar_select %p290, %s22, 0
      %s292 = sadd.s32 %s291, %s289
      %s293 = smul.addr %s292, 8
      %s294 = scalar_lea.vmem %s1, %s293
      %p295 = scmp.lt.s32.totalorder %s21, 1
      %s296 = scalar_select %p295, %s21, 1
      %p297 = scmp.lt.s32.totalorder %s22, 0
      %s298 = scalar_select %p297, %s22, 0
      %s299 = sadd.s32 %s298, %s296
      %s300 = smul.addr %s299, 8
      %s301 = scalar_lea.vmem %s3, %s300
      %p302 = scmp.lt.s32.totalorder %s21, 1
      %s303 = scalar_select %p302, %s21, 1
      %p304 = scmp.lt.s32.totalorder %s22, 0
      %s305 = scalar_select %p304, %s22, 0
      %s306 = sadd.s32 %s305, %s303
      %s307 = smul.addr %s306, 8
      %s308 = scalar_lea.vmem %s4, %s307
      %p309 = scmp.lt.s32.totalorder %s21, 1
      %s310 = scalar_select %p309, %s21, 1
      %p311 = scmp.lt.s32.totalorder %s22, 0
      %s312 = scalar_select %p311, %s22, 0
      %s313 = sadd.s32 %s312, %s310
      %s314 = smul.addr %s313, 8
      %s315 = scalar_lea.vmem %s5, %s314
      %v316 = vld [vmem:[%s287] sm:$0xff]
      %v317 = vld [vmem:[%s294] sm:$0xff]
      %v318 = vld [vmem:[%s2] sm:$0x1]
      %vm319 = vcmask 130048
      %v320 = vsel %vm319, %v316, -inf
      %321 = vmax.xlane.f32.xlu0 %v320
      %v322 = vpop.xlane.xlu0 %321
      %v323 = vsub.f32 %v316, %v322
      %v324 = vmul.f32 %v323, 1.442695
      %v325 = vpow.pop %v324
      %v326 = vsel %vm319, %v325, 0.0
      %327 = vadd.xlane.f32.xlu0 %v326
      %v328 = vpop.xlane.xlu0 %327
      %v329 = vlog2.pop %v328
      %v330 = vmul.f32 %v329, 0.6931472
      %v331 = vsub.f32 %v323, %v330
      %v332 = vlaneseq
      %v333 = vand.u32 %v332, 127
      %334 = vset.pattern.permute.xlu0 0
      %335 = vperm.xlu0 %334, %v317
      %v336 = vpop.permute.xlu0 %335
      %vm337 = vcmp.eq.s32.totalorder %v333, %v336
      %v338 = vsel %vm337, %v331, 0.0
      %v339 = vsel %vm319, %v338, 0.0
      %340 = vadd.xlane.f32.xlu0 %v339
      %v341 = vpop.xlane.xlu0 %340
      %v343 = vlaneseq
      %v344 = vshrl.u32 %v343, 7
      %v345 = vsub.s32 0, %v344
      %v346 = vrot.slane %v318, %v345
      %v348 = vsel %vm337, %v346, 0.0
      %v349 = vsel %vm319, %v348, 0.0
      %350 = vadd.xlane.f32.xlu0 %v349
      %v351 = vpop.xlane.xlu0 %350
      %v352 = vmul.f32 %v341, 1.442695
      %v353 = vpow.pop %v352
      %vm354 = vcmask 7168
      %355 = vst.msk [vmem:[%s301] sm:$0xff] %vm354, %v353
      %v356 = vsub.f32 0.0, %v351
      %v357 = vmul.f32 %v356, %v341
      %358 = vst.msk [vmem:[%s308] sm:$0xff] %vm354, %v357
      %v359 = vsub.f32 0.0, %v318
      %v361 = vlaneseq
      %v362 = vshrl.u32 %v361, 7
      %v363 = vsub.s32 0, %v362
      %v364 = vrot.slane %v359, %v363
      %v366 = vmul.f32 %v364, %v331
      %367 = vst.msk [vmem:[%s315] sm:$0xff] %vm354, %v366
      %p368 = scmp.lt.s32.totalorder %s21, 1
      %s369 = scalar_select %p368, %s21, 1
      %p370 = scmp.lt.s32.totalorder %s22, 0
      %s371 = scalar_select %p370, %s22, 0
      %s372 = sadd.s32 %s371, %s369
      %s373 = smul.addr %s372, 8
      %s374 = scalar_lea.vmem %s3, %s373
      %p375 = scmp.lt.s32.totalorder %s21, 1
      %s376 = scalar_select %p375, %s21, 1
      %p377 = scmp.lt.s32.totalorder %s22, 0
      %s378 = scalar_select %p377, %s22, 0
      %s379 = sadd.s32 %s378, %s376
      %s380 = smul.addr %s379, 8
      %s381 = scalar_lea.vmem %s4, %s380
      %p382 = scmp.lt.s32.totalorder %s21, 1
      %s383 = scalar_select %p382, %s21, 1
      %p384 = scmp.lt.s32.totalorder %s22, 0
      %s385 = scalar_select %p384, %s22, 0
      %s386 = sadd.s32 %s385, %s383
      %s387 = smul.addr %s386, 8
      %s388 = scalar_lea.vmem %s5, %s387
      // Predicated region
      $region33: #{bag_loss_with_margin.2} parent=31 // pred_check
        %p389 = pneg %p126
      $region34: #{bag_loss_with_margin.2} parent=31 // pred_check_branch
        %391 = sbr.rel (%p389) target = $region36
      $region35: #{bag_loss_with_margin.2} parent=31 // pred_region
        _
      $region36: #{bag_loss_with_margin.2} parent=31 // pred_fallthru
        _
      // Predicated region
      $region37: #{bag_loss_with_margin.2} parent=31 // pred_check
        %p392 = pneg %p154
      $region38: #{bag_loss_with_margin.2} parent=31 // pred_check_branch
        %394 = sbr.rel (%p392) target = $region40
      $region39: #{bag_loss_with_margin.2} parent=31 // pred_region
        _
      $region40: #{bag_loss_with_margin.2} parent=31 // pred_fallthru
        _
      // Predicated region
      $region41: #{bag_loss_with_margin.2} parent=31 // pred_check
        %p395 = pneg %p182
      $region42: #{bag_loss_with_margin.2} parent=31 // pred_check_branch
        %397 = sbr.rel (%p395) target = $region44
      $region43: #{bag_loss_with_margin.2} parent=31 // pred_region
        _
      $region44: #{bag_loss_with_margin.2} parent=31 // pred_fallthru
        _
    $region32: #{bag_loss_with_margin.2} parent=5 // pred_fallthru
      _
    %p398 = scmp.le.s32.totalorder 2, %s12
    // Predicated region
    $region45: #{bag_loss_with_margin.2} parent=5 // pred_check
      %p399 = pneg %p398
    $region46: #{bag_loss_with_margin.2} parent=5 // pred_check_branch
      %401 = sbr.rel (%p399) target = $region48
    $region47: #{bag_loss_with_margin.2} parent=5 // pred_region
      %s402 = ssub.s32 %s12, 2
      // Predicated region
      $region49: #{bag_loss_with_margin.2} parent=47 // pred_check
        %p403 = pneg %p132
      $region50: #{bag_loss_with_margin.2} parent=47 // pred_check_branch
        %405 = sbr.rel (%p403) target = $region52
      $region51: #{bag_loss_with_margin.2} parent=47 // pred_region
        %p406 = scmp.lt.s32.totalorder %s23, 1
        %s407 = scalar_select %p406, %s23, 1
        %p408 = scmp.lt.s32.totalorder %s24, 0
        %s409 = scalar_select %p408, %s24, 0
        %s410 = sadd.s32 %s409, %s407
        %s411 = smul.addr %s410, 8
        %s412 = scalar_lea.vmem %s3, %s411
      $region52: #{bag_loss_with_margin.2} parent=47 // pred_fallthru
        _
      // Predicated region
      $region53: #{bag_loss_with_margin.2} parent=47 // pred_check
        %p413 = pneg %p160
      $region54: #{bag_loss_with_margin.2} parent=47 // pred_check_branch
        %415 = sbr.rel (%p413) target = $region56
      $region55: #{bag_loss_with_margin.2} parent=47 // pred_region
        %p416 = scmp.lt.s32.totalorder %s23, 1
        %s417 = scalar_select %p416, %s23, 1
        %p418 = scmp.lt.s32.totalorder %s24, 0
        %s419 = scalar_select %p418, %s24, 0
        %s420 = sadd.s32 %s419, %s417
        %s421 = smul.addr %s420, 8
        %s422 = scalar_lea.vmem %s4, %s421
      $region56: #{bag_loss_with_margin.2} parent=47 // pred_fallthru
        _
      // Predicated region
      $region57: #{bag_loss_with_margin.2} parent=47 // pred_check
        %p423 = pneg %p188
      $region58: #{bag_loss_with_margin.2} parent=47 // pred_check_branch
        %425 = sbr.rel (%p423) target = $region60
      $region59: #{bag_loss_with_margin.2} parent=47 // pred_region
        %p426 = scmp.lt.s32.totalorder %s23, 1
        %s427 = scalar_select %p426, %s23, 1
        %p428 = scmp.lt.s32.totalorder %s24, 0
        %s429 = scalar_select %p428, %s24, 0
        %s430 = sadd.s32 %s429, %s427
        %s431 = smul.addr %s430, 8
        %s432 = scalar_lea.vmem %s5, %s431
      $region60: #{bag_loss_with_margin.2} parent=47 // pred_fallthru
        _
    $region48: #{bag_loss_with_margin.2} parent=5 // pred_fallthru
      _
  $region6: #{bag_loss_with_margin.2} parent=0 // loop_footer
    %s16 = sadd.s32 1, %s12
  $region7: #{bag_loss_with_margin.2} parent=0 // loop_footer_branch
    %11 = sbr.rel target = $region3
  $region8: #{bag_loss_with_margin.2} parent=0 // loop_exit
    _

// kernel: bag_loss_with_margin.3
$region0: #{bag_loss_with_margin.3}
  #allocation0 [shape = 'u32[]', space=smem, size = 0x4, offset = 0x4, fixed_abs, tag = 'smem constant byte address 0x4 - core index']
  #allocation1 [shape = 'u32[144,128]{1,0:T(1,128)}', space=vmem, size = 0x12000, scoped, tag = 'internal scratch']
  %s0 = inlined_call_operand.vmem [shape: f32[2,1,8], index: 0, kind: input, shape index: {}]
  %s1 = inlined_call_operand.vmem [shape: s8[2,8,8], index: 1, kind: input, shape index: {}]
  %s2 = inlined_call_operand.vmem [shape: f32[2,8,1], index: 2, kind: input, shape index: {}]
  %s3 = inlined_call_operand.vmem [shape: f32[2,8,1], index: 3, kind: input, shape index: {}]
  %s4 = inlined_call_operand.vmem [shape: f32[2,8,1], index: 4, kind: input, shape index: {}]
  %s5 = inlined_call_operand.vmem [shape: f32[2,8,1], index: 5, kind: input, shape index: {}]
  %s6 = inlined_call_operand.vmem [shape: f32[2,8,1], index: 6, kind: input, shape index: {}]
  %s7 = inlined_call_operand.vmem [shape: f32[2,1,8,128], index: 7, kind: output, shape index: {}]
  %s8 = sld [smem:[#allocation0]]
  $region61: #{bag_loss_with_margin.3} parent=0
    _
  %s10 = ssub.s32 1, %s8
  %s11 = scalar_select 0, %s10, %s8
  loop: start=0, step=1, limit=4
  $region2: #{bag_loss_with_margin.3} parent=0 // loop_pre_header
    _
  $region3: #{bag_loss_with_margin.3} parent=0 // loop_header
    %s13 = sphi 0, %s17
    %p14 = scmp.ge.s32.totalorder %s13, 4
    %s20 = sphi 0, %s32
    %s21 = sphi 0, %s28
    %s22 = sphi 0, %s20
    %s23 = sphi 0, %s21
    %s24 = sphi 0, %s22
    %s25 = sphi 0, %s23
    %s35 = sphi 0, %s37
    %s38 = sphi 0, %s35
    %s39 = sphi 0, %s38
    %s55 = sphi 0, %s39
    %s63 = sphi 0, %s65
    %s66 = sphi 0, %s63
    %s67 = sphi 0, %s66
    %s83 = sphi 0, %s67
    %s91 = sphi 0, %s93
    %s94 = sphi 0, %s91
    %s95 = sphi 0, %s94
    %s111 = sphi 0, %s95
    %s119 = sphi 0, %s121
    %s122 = sphi 0, %s119
    %s123 = sphi 0, %s122
    %s139 = sphi 0, %s123
    %s147 = sphi 0, %s149
    %s150 = sphi 0, %s147
    %s151 = sphi 0, %s150
    %s167 = sphi 0, %s151
    %s175 = sphi 0, %s177
    %s178 = sphi 0, %s175
    %s179 = sphi 0, %s178
    %s195 = sphi 0, %s179
    %s203 = sphi 0, %s205
    %s206 = sphi 0, %s203
    %s207 = sphi 0, %s206
    %s223 = sphi 0, %s207
    %s231 = sphi 0, %s233
    %s234 = sphi 0, %s231
    %s235 = sphi 0, %s234
    %s251 = sphi 0, %s235
  $region4: #{bag_loss_with_margin.3} parent=0 // loop_header_branch
    %16 = sbr.rel (%p14) target = $region8
  $region5: #{bag_loss_with_margin.3} parent=0 // loop_body
    %s18 = ssub.s32 %s13, 1
    %s19 = ssub.s32 %s13, 2
    %s26 = sadd.s32 1, %s21
    %p27 = scmp.ge.s32.totalorder %s26, 1
    %s28 = scalar_select %p27, 0, %s26
    %s29 = sadd.s32 1, %s20
    %s30 = scalar_select %p27, %s29, %s20
    %p31 = scmp.ge.s32.totalorder %s30, 2
    %s32 = scalar_select %p31, 0, %s30
    %s33 = ssub.s32 %s20, %s32
    %p34 = scmp.eq.s32.totalorder %s33, 0
    %s36 = sadd.s32 %s35, 1
    %s37 = scalar_select %p34, %s35, %s36
    %p40 = pneg %p34
    %p41 = scmp.eq.s32.totalorder %s13, 1
    %p42 = por %p40, %p41
    %p43 = scmp.ne.s32.totalorder %s35, %s38
    %p44 = scmp.eq.s32.totalorder %s13, 0
    %p45 = por %p43, %p44
    %p46 = scmp.ne.s32.totalorder %s35, %s38
    %p47 = scmp.eq.s32.totalorder %s18, 1
    %p48 = por %p46, %p47
    %p49 = scmp.ne.s32.totalorder %s38, %s39
    %p50 = scmp.eq.s32.totalorder %s18, 0
    %p51 = por %p49, %p50
    %p52 = scmp.ne.s32.totalorder %s38, %s39
    %p53 = scmp.eq.s32.totalorder %s19, 1
    %p54 = por %p52, %p53
    %p56 = scmp.ne.s32.totalorder %s39, %s55
    %p57 = scmp.eq.s32.totalorder %s19, 0
    %p58 = por %p56, %p57
    %s59 = ssub.s32 %s20, %s32
    %s60 = ssub.s32 %s21, %s28
    %s61 = sor.u32 %s59, %s60
    %p62 = scmp.eq.s32.totalorder %s61, 0
    %s64 = sadd.s32 %s63, 1
    %s65 = scalar_select %p62, %s63, %s64
    %p68 = pneg %p62
    %p69 = scmp.eq.s32.totalorder %s13, 1
    %p70 = por %p68, %p69
    %p71 = scmp.ne.s32.totalorder %s63, %s66
    %p72 = scmp.eq.s32.totalorder %s13, 0
    %p73 = por %p71, %p72
    %p74 = scmp.ne.s32.totalorder %s63, %s66
    %p75 = scmp.eq.s32.totalorder %s18, 1
    %p76 = por %p74, %p75
    %p77 = scmp.ne.s32.totalorder %s66, %s67
    %p78 = scmp.eq.s32.totalorder %s18, 0
    %p79 = por %p77, %p78
    %p80 = scmp.ne.s32.totalorder %s66, %s67
    %p81 = scmp.eq.s32.totalorder %s19, 1
    %p82 = por %p80, %p81
    %p84 = scmp.ne.s32.totalorder %s67, %s83
    %p85 = scmp.eq.s32.totalorder %s19, 0
    %p86 = por %p84, %p85
    %s87 = ssub.s32 %s20, %s32
    %s88 = ssub.s32 %s21, %s28
    %s89 = sor.u32 %s87, %s88
    %p90 = scmp.eq.s32.totalorder %s89, 0
    %s92 = sadd.s32 %s91, 1
    %s93 = scalar_select %p90, %s91, %s92
    %p96 = pneg %p90
    %p97 = scmp.eq.s32.totalorder %s13, 1
    %p98 = por %p96, %p97
    %p99 = scmp.ne.s32.totalorder %s91, %s94
    %p100 = scmp.eq.s32.totalorder %s13, 0
    %p101 = por %p99, %p100
    %p102 = scmp.ne.s32.totalorder %s91, %s94
    %p103 = scmp.eq.s32.totalorder %s18, 1
    %p104 = por %p102, %p103
    %p105 = scmp.ne.s32.totalorder %s94, %s95
    %p106 = scmp.eq.s32.totalorder %s18, 0
    %p107 = por %p105, %p106
    %p108 = scmp.ne.s32.totalorder %s94, %s95
    %p109 = scmp.eq.s32.totalorder %s19, 1
    %p110 = por %p108, %p109
    %p112 = scmp.ne.s32.totalorder %s95, %s111
    %p113 = scmp.eq.s32.totalorder %s19, 0
    %p114 = por %p112, %p113
    %s115 = ssub.s32 %s20, %s32
    %s116 = ssub.s32 %s21, %s28
    %s117 = sor.u32 %s115, %s116
    %p118 = scmp.eq.s32.totalorder %s117, 0
    %s120 = sadd.s32 %s119, 1
    %s121 = scalar_select %p118, %s119, %s120
    %p124 = pneg %p118
    %p125 = scmp.eq.s32.totalorder %s13, 1
    %p126 = por %p124, %p125
    %p127 = scmp.ne.s32.totalorder %s119, %s122
    %p128 = scmp.eq.s32.totalorder %s13, 0
    %p129 = por %p127, %p128
    %p130 = scmp.ne.s32.totalorder %s119, %s122
    %p131 = scmp.eq.s32.totalorder %s18, 1
    %p132 = por %p130, %p131
    %p133 = scmp.ne.s32.totalorder %s122, %s123
    %p134 = scmp.eq.s32.totalorder %s18, 0
    %p135 = por %p133, %p134
    %p136 = scmp.ne.s32.totalorder %s122, %s123
    %p137 = scmp.eq.s32.totalorder %s19, 1
    %p138 = por %p136, %p137
    %p140 = scmp.ne.s32.totalorder %s123, %s139
    %p141 = scmp.eq.s32.totalorder %s19, 0
    %p142 = por %p140, %p141
    %s143 = ssub.s32 %s20, %s32
    %s144 = ssub.s32 %s21, %s28
    %s145 = sor.u32 %s143, %s144
    %p146 = scmp.eq.s32.totalorder %s145, 0
    %s148 = sadd.s32 %s147, 1
    %s149 = scalar_select %p146, %s147, %s148
    %p152 = pneg %p146
    %p153 = scmp.eq.s32.totalorder %s13, 1
    %p154 = por %p152, %p153
    %p155 = scmp.ne.s32.totalorder %s147, %s150
    %p156 = scmp.eq.s32.totalorder %s13, 0
    %p157 = por %p155, %p156
    %p158 = scmp.ne.s32.totalorder %s147, %s150
    %p159 = scmp.eq.s32.totalorder %s18, 1
    %p160 = por %p158, %p159
    %p161 = scmp.ne.s32.totalorder %s150, %s151
    %p162 = scmp.eq.s32.totalorder %s18, 0
    %p163 = por %p161, %p162
    %p164 = scmp.ne.s32.totalorder %s150, %s151
    %p165 = scmp.eq.s32.totalorder %s19, 1
    %p166 = por %p164, %p165
    %p168 = scmp.ne.s32.totalorder %s151, %s167
    %p169 = scmp.eq.s32.totalorder %s19, 0
    %p170 = por %p168, %p169
    %s171 = ssub.s32 %s20, %s32
    %s172 = ssub.s32 %s21, %s28
    %s173 = sor.u32 %s171, %s172
    %p174 = scmp.eq.s32.totalorder %s173, 0
    %s176 = sadd.s32 %s175, 1
    %s177 = scalar_select %p174, %s175, %s176
    %p180 = pneg %p174
    %p181 = scmp.eq.s32.totalorder %s13, 1
    %p182 = por %p180, %p181
    %p183 = scmp.ne.s32.totalorder %s175, %s178
    %p184 = scmp.eq.s32.totalorder %s13, 0
    %p185 = por %p183, %p184
    %p186 = scmp.ne.s32.totalorder %s175, %s178
    %p187 = scmp.eq.s32.totalorder %s18, 1
    %p188 = por %p186, %p187
    %p189 = scmp.ne.s32.totalorder %s178, %s179
    %p190 = scmp.eq.s32.totalorder %s18, 0
    %p191 = por %p189, %p190
    %p192 = scmp.ne.s32.totalorder %s178, %s179
    %p193 = scmp.eq.s32.totalorder %s19, 1
    %p194 = por %p192, %p193
    %p196 = scmp.ne.s32.totalorder %s179, %s195
    %p197 = scmp.eq.s32.totalorder %s19, 0
    %p198 = por %p196, %p197
    %s199 = ssub.s32 %s20, %s32
    %s200 = ssub.s32 %s21, %s28
    %s201 = sor.u32 %s199, %s200
    %p202 = scmp.eq.s32.totalorder %s201, 0
    %s204 = sadd.s32 %s203, 1
    %s205 = scalar_select %p202, %s203, %s204
    %p208 = pneg %p202
    %p209 = scmp.eq.s32.totalorder %s13, 1
    %p210 = por %p208, %p209
    %p211 = scmp.ne.s32.totalorder %s203, %s206
    %p212 = scmp.eq.s32.totalorder %s13, 0
    %p213 = por %p211, %p212
    %p214 = scmp.ne.s32.totalorder %s203, %s206
    %p215 = scmp.eq.s32.totalorder %s18, 1
    %p216 = por %p214, %p215
    %p217 = scmp.ne.s32.totalorder %s206, %s207
    %p218 = scmp.eq.s32.totalorder %s18, 0
    %p219 = por %p217, %p218
    %p220 = scmp.ne.s32.totalorder %s206, %s207
    %p221 = scmp.eq.s32.totalorder %s19, 1
    %p222 = por %p220, %p221
    %p224 = scmp.ne.s32.totalorder %s207, %s223
    %p225 = scmp.eq.s32.totalorder %s19, 0
    %p226 = por %p224, %p225
    %s227 = ssub.s32 %s20, %s32
    %s228 = ssub.s32 %s21, %s28
    %s229 = sor.u32 %s227, %s228
    %p230 = scmp.eq.s32.totalorder %s229, 0
    %s232 = sadd.s32 %s231, 1
    %s233 = scalar_select %p230, %s231, %s232
    %p236 = pneg %p230
    %p237 = scmp.eq.s32.totalorder %s13, 1
    %p238 = por %p236, %p237
    %p239 = scmp.ne.s32.totalorder %s231, %s234
    %p240 = scmp.eq.s32.totalorder %s13, 0
    %p241 = por %p239, %p240
    %p242 = scmp.ne.s32.totalorder %s231, %s234
    %p243 = scmp.eq.s32.totalorder %s18, 1
    %p244 = por %p242, %p243
    %p245 = scmp.ne.s32.totalorder %s234, %s235
    %p246 = scmp.eq.s32.totalorder %s18, 0
    %p247 = por %p245, %p246
    %p248 = scmp.ne.s32.totalorder %s234, %s235
    %p249 = scmp.eq.s32.totalorder %s19, 1
    %p250 = por %p248, %p249
    %p252 = scmp.ne.s32.totalorder %s235, %s251
    %p253 = scmp.eq.s32.totalorder %s19, 0
    %p254 = por %p252, %p253
    %p255 = scmp.le.s32.totalorder 1, %s13
    %p256 = scmp.lt.s32.totalorder %s13, 3
    %p257 = pnand %p255, %p256
    %p258 = pneg %p257
    // Predicated region
    $region9: #{bag_loss_with_margin.3} parent=5 // pred_check
      _
    $region10: #{bag_loss_with_margin.3} parent=5 // pred_check_branch
      %260 = sbr.rel (%p257) target = $region12
    $region11: #{bag_loss_with_margin.3} parent=5 // pred_region
      %s261 = ssub.s32 %s13, 1
    $region12: #{bag_loss_with_margin.3} parent=5 // pred_fallthru
      _
    %p262 = scmp.lt.s32.totalorder %s13, 2
    // Predicated region
    $region13: #{bag_loss_with_margin.3} parent=5 // pred_check
      %p263 = pneg %p262
    $region14: #{bag_loss_with_margin.3} parent=5 // pred_check_branch
      %265 = sbr.rel (%p263) target = $region16
    $region15: #{bag_loss_with_margin.3} parent=5 // pred_region
      // Predicated region
      $region17: #{bag_loss_with_margin.3} parent=15 // pred_check
        %p266 = pneg %p45
      $region18: #{bag_loss_with_margin.3} parent=15 // pred_check_branch
        %268 = sbr.rel (%p266) target = $region20
      $region19: #{bag_loss_with_margin.3} parent=15 // pred_region
        %p269 = scmp.lt.s32.totalorder %s20, 1
        %s270 = scalar_select %p269, %s20, 1
        %s271 = scalar_lea.vmem %s0, %s270
      $region20: #{bag_loss_with_margin.3} parent=15 // pred_fallthru
        _
      // Predicated region
      $region21: #{bag_loss_with_margin.3} parent=15 // pred_check
        %p272 = pneg %p73
      $region22: #{bag_loss_with_margin.3} parent=15 // pred_check_branch
        %274 = sbr.rel (%p272) target = $region24
      $region23: #{bag_loss_with_margin.3} parent=15 // pred_region
        %p275 = scmp.lt.s32.totalorder %s20, 1
        %s276 = scalar_select %p275, %s20, 1
        %p277 = scmp.lt.s32.totalorder %s21, 0
        %s278 = scalar_select %p277, %s21, 0
        %s279 = sadd.s32 %s278, %s276
        %s280 = smul.addr %s279, 2
        %s281 = scalar_lea.vmem %s1, %s280
      $region24: #{bag_loss_with_margin.3} parent=15 // pred_fallthru
        _
      // Predicated region
      $region25: #{bag_loss_with_margin.3} parent=15 // pred_check
        %p282 = pneg %p101
      $region26: #{bag_loss_with_margin.3} parent=15 // pred_check_branch
        %284 = sbr.rel (%p282) target = $region28
      $region27: #{bag_loss_with_margin.3} parent=15 // pred_region
        %p285 = scmp.lt.s32.totalorder %s20, 1
        %s286 = scalar_select %p285, %s20, 1
        %p287 = scmp.lt.s32.totalorder %s21, 0
        %s288 = scalar_select %p287, %s21, 0
        %s289 = sadd.s32 %s288, %s286
        %s290 = smul.addr %s289, 8
        %s291 = scalar_lea.vmem %s2, %s290
      $region28: #{bag_loss_with_margin.3} parent=15 // pred_fallthru
        _
      // Predicated region
      $region29: #{bag_loss_with_margin.3} parent=15 // pred_check
        %p292 = pneg %p129
      $region30: #{bag_loss_with_margin.3} parent=15 // pred_check_branch
        %294 = sbr.rel (%p292) target = $region32
      $region31: #{bag_loss_with_margin.3} parent=15 // pred_region
        %p295 = scmp.lt.s32.totalorder %s20, 1
        %s296 = scalar_select %p295, %s20, 1
        %p297 = scmp.lt.s32.totalorder %s21, 0
        %s298 = scalar_select %p297, %s21, 0
        %s299 = sadd.s32 %s298, %s296
        %s300 = smul.addr %s299, 8
        %s301 = scalar_lea.vmem %s3, %s300
      $region32: #{bag_loss_with_margin.3} parent=15 // pred_fallthru
        _
      // Predicated region
      $region33: #{bag_loss_with_margin.3} parent=15 // pred_check
        %p302 = pneg %p157
      $region34: #{bag_loss_with_margin.3} parent=15 // pred_check_branch
        %304 = sbr.rel (%p302) target = $region36
      $region35: #{bag_loss_with_margin.3} parent=15 // pred_region
        %p305 = scmp.lt.s32.totalorder %s20, 1
        %s306 = scalar_select %p305, %s20, 1
        %p307 = scmp.lt.s32.totalorder %s21, 0
        %s308 = scalar_select %p307, %s21, 0
        %s309 = sadd.s32 %s308, %s306
        %s310 = smul.addr %s309, 8
        %s311 = scalar_lea.vmem %s4, %s310
      $region36: #{bag_loss_with_margin.3} parent=15 // pred_fallthru
        _
      // Predicated region
      $region37: #{bag_loss_with_margin.3} parent=15 // pred_check
        %p312 = pneg %p185
      $region38: #{bag_loss_with_margin.3} parent=15 // pred_check_branch
        %314 = sbr.rel (%p312) target = $region40
      $region39: #{bag_loss_with_margin.3} parent=15 // pred_region
        %p315 = scmp.lt.s32.totalorder %s20, 1
        %s316 = scalar_select %p315, %s20, 1
        %p317 = scmp.lt.s32.totalorder %s21, 0
        %s318 = scalar_select %p317, %s21, 0
        %s319 = sadd.s32 %s318, %s316
        %s320 = smul.addr %s319, 8
        %s321 = scalar_lea.vmem %s5, %s320
      $region40: #{bag_loss_with_margin.3} parent=15 // pred_fallthru
        _
      // Predicated region
      $region41: #{bag_loss_with_margin.3} parent=15 // pred_check
        %p322 = pneg %p213
      $region42: #{bag_loss_with_margin.3} parent=15 // pred_check_branch
        %324 = sbr.rel (%p322) target = $region44
      $region43: #{bag_loss_with_margin.3} parent=15 // pred_region
        %p325 = scmp.lt.s32.totalorder %s20, 1
        %s326 = scalar_select %p325, %s20, 1
        %p327 = scmp.lt.s32.totalorder %s21, 0
        %s328 = scalar_select %p327, %s21, 0
        %s329 = sadd.s32 %s328, %s326
        %s330 = smul.addr %s329, 8
        %s331 = scalar_lea.vmem %s6, %s330
      $region44: #{bag_loss_with_margin.3} parent=15 // pred_fallthru
        _
    $region16: #{bag_loss_with_margin.3} parent=5 // pred_fallthru
      _
    %p332 = scmp.le.s32.totalorder 1, %s13
    %p333 = scmp.lt.s32.totalorder %s13, 3
    %p334 = pnand %p332, %p333
    %p335 = pneg %p334
    // Predicated region
    $region45: #{bag_loss_with_margin.3} parent=5 // pred_check
      _
    $region46: #{bag_loss_with_margin.3} parent=5 // pred_check_branch
      %337 = sbr.rel (%p334) target = $region48
    $region47: #{bag_loss_with_margin.3} parent=5 // pred_region
      %s338 = ssub.s32 %s13, 1
      %p339 = scmp.lt.s32.totalorder %s22, 1
      %s340 = scalar_select %p339, %s22, 1
      %s341 = scalar_lea.vmem %s0, %s340
      %p342 = pneg %p51
      %p343 = pneg %p48
      %p344 = scmp.lt.s32.totalorder %s22, 1
      %s345 = scalar_select %p344, %s22, 1
      %p346 = scmp.lt.s32.totalorder %s23, 0
      %s347 = scalar_select %p346, %s23, 0
      %s348 = sadd.s32 %s347, %s345
      %s349 = smul.addr %s348, 2
      %s350 = scalar_lea.vmem %s1, %s349
      %p351 = pneg %p79
      %p352 = pneg %p76
      %p353 = scmp.lt.s32.totalorder %s22, 1
      %s354 = scalar_select %p353, %s22, 1
      %p355 = scmp.lt.s32.totalorder %s23, 0
      %s356 = scalar_select %p355, %s23, 0
      %s357 = sadd.s32 %s356, %s354
      %s358 = smul.addr %s357, 8
      %s359 = scalar_lea.vmem %s2, %s358
      %p360 = pneg %p107
      %p361 = pneg %p104
      %p362 = scmp.lt.s32.totalorder %s22, 1
      %s363 = scalar_select %p362, %s22, 1
      %p364 = scmp.lt.s32.totalorder %s23, 0
      %s365 = scalar_select %p364, %s23, 0
      %s366 = sadd.s32 %s365, %s363
      %s367 = smul.addr %s366, 8
      %s368 = scalar_lea.vmem %s3, %s367
      %p369 = pneg %p135
      %p370 = pneg %p132
      %p371 = scmp.lt.s32.totalorder %s22, 1
      %s372 = scalar_select %p371, %s22, 1
      %p373 = scmp.lt.s32.totalorder %s23, 0
      %s374 = scalar_select %p373, %s23, 0
      %s375 = sadd.s32 %s374, %s372
      %s376 = smul.addr %s375, 8
      %s377 = scalar_lea.vmem %s4, %s376
      %p378 = pneg %p163
      %p379 = pneg %p160
      %p380 = scmp.lt.s32.totalorder %s22, 1
      %s381 = scalar_select %p380, %s22, 1
      %p382 = scmp.lt.s32.totalorder %s23, 0
      %s383 = scalar_select %p382, %s23, 0
      %s384 = sadd.s32 %s383, %s381
      %s385 = smul.addr %s384, 8
      %s386 = scalar_lea.vmem %s5, %s385
      %p387 = pneg %p191
      %p388 = pneg %p188
      %p389 = scmp.lt.s32.totalorder %s22, 1
      %s390 = scalar_select %p389, %s22, 1
      %p391 = scmp.lt.s32.totalorder %s23, 0
      %s392 = scalar_select %p391, %s23, 0
      %s393 = sadd.s32 %s392, %s390
      %s394 = smul.addr %s393, 8
      %s395 = scalar_lea.vmem %s6, %s394
      %p396 = pneg %p219
      %p397 = pneg %p216
      %p398 = pneg %p247
      %p399 = pneg %p244
      %p400 = scmp.lt.s32.totalorder %s22, 1
      %s401 = scalar_select %p400, %s22, 1
      %p402 = scmp.lt.s32.totalorder %s23, 0
      %s403 = scalar_select %p402, %s23, 0
      %s404 = sadd.s32 %s403, %s401
      %s405 = smul.addr %s404, 8
      %s406 = scalar_lea.vmem %s7, %s405
      %p407 = scmp.lt.s32.totalorder %s22, 1
      %s408 = scalar_select %p407, %s22, 1
      %s409 = scalar_lea.vmem %s0, %s408
      %p410 = scmp.lt.s32.totalorder %s22, 1
      %s411 = scalar_select %p410, %s22, 1
      %p412 = scmp.lt.s32.totalorder %s23, 0
      %s413 = scalar_select %p412, %s23, 0
      %s414 = sadd.s32 %s413, %s411
      %s415 = smul.addr %s414, 2
      %s416 = scalar_lea.vmem %s1, %s415
      %p417 = scmp.lt.s32.totalorder %s22, 1
      %s418 = scalar_select %p417, %s22, 1
      %p419 = scmp.lt.s32.totalorder %s23, 0
      %s420 = scalar_select %p419, %s23, 0
      %s421 = sadd.s32 %s420, %s418
      %s422 = smul.addr %s421, 8
      %s423 = scalar_lea.vmem %s2, %s422
      %p424 = scmp.lt.s32.totalorder %s22, 1
      %s425 = scalar_select %p424, %s22, 1
      %p426 = scmp.lt.s32.totalorder %s23, 0
      %s427 = scalar_select %p426, %s23, 0
      %s428 = sadd.s32 %s427, %s425
      %s429 = smul.addr %s428, 8
      %s430 = scalar_lea.vmem %s3, %s429
      %p431 = scmp.lt.s32.totalorder %s22, 1
      %s432 = scalar_select %p431, %s22, 1
      %p433 = scmp.lt.s32.totalorder %s23, 0
      %s434 = scalar_select %p433, %s23, 0
      %s435 = sadd.s32 %s434, %s432
      %s436 = smul.addr %s435, 8
      %s437 = scalar_lea.vmem %s4, %s436
      %p438 = scmp.lt.s32.totalorder %s22, 1
      %s439 = scalar_select %p438, %s22, 1
      %p440 = scmp.lt.s32.totalorder %s23, 0
      %s441 = scalar_select %p440, %s23, 0
      %s442 = sadd.s32 %s441, %s439
      %s443 = smul.addr %s442, 8
      %s444 = scalar_lea.vmem %s5, %s443
      %p445 = scmp.lt.s32.totalorder %s22, 1
      %s446 = scalar_select %p445, %s22, 1
      %p447 = scmp.lt.s32.totalorder %s23, 0
      %s448 = scalar_select %p447, %s23, 0
      %s449 = sadd.s32 %s448, %s446
      %s450 = smul.addr %s449, 8
      %s451 = scalar_lea.vmem %s6, %s450
      %p452 = scmp.lt.s32.totalorder %s22, 1
      %s453 = scalar_select %p452, %s22, 1
      %p454 = scmp.lt.s32.totalorder %s23, 0
      %s455 = scalar_select %p454, %s23, 0
      %s456 = sadd.s32 %s455, %s453
      %s457 = smul.addr %s456, 8
      %s458 = scalar_lea.vmem %s7, %s457
      %v459 = vld [vmem:[%s409] sm:$0x1]
      %v460 = vld [vmem:[%s416] sm:$0x3]
      %v461 = vunpack.c.0.s8 %v460
      %v462 = vcvt.s32.f32 %v461
      %v463 = vld [vmem:[%s423] sm:$0xff]
      %v464 = vld [vmem:[%s430] sm:$0xff]
      %v465 = vld [vmem:[%s437] sm:$0xff]
      %v466 = vld [vmem:[%s444] sm:$0xff]
      %v467 = vld [vmem:[%s451] sm:$0xff]
      %v469 = vlaneseq
      %v470 = vshrl.u32 %v469, 7
      %v471 = vsub.s32 0, %v470
      %v472 = vrot.slane %v459, %v471
      %v474 = vmul.f32 %v472, %v462
      %vm475 = vcmask 64512
      %v476 = vsel %vm475, %v474, -inf
      %477 = vmax.xlane.f32.xlu0 %v476
      %v478 = vpop.xlane.xlu0 %477
      %vm479 = vcmp.gt.f32.partialorder %v478, 0.0
      %v480 = vrcp.pop %v478
      %v481 = vmul.f32 %v463, %v480
      %v482 = vsel %vm479, %v481, 0.0
      %v483 = vadd.f32 %v464, %v466
      %v484 = vmul.f32 %v482, %v483
      %v485 = vsub.f32 1.0, %v482
      %v486 = vmul.f32 %v485, %v465
      %v487 = vadd.f32 %v484, %v486
      %v488 = vmul.f32 %v487, %v467
      %vm489 = vcmask 7168
      %v490 = vsel %vm489, %v488, 0.0
      %491 = vadd.xlane.f32.xlu0 %v490
      %v492 = vpop.xlane.xlu0 %491
      %v493 = vrot.slane %v492, 4
      %v494 = vadd.f32 %v492, %v493
      %v495 = vrot.slane %v494, 2
      %v496 = vadd.f32 %v494, %v495
      %v497 = vrot.slane %v496, 1
      %v498 = vadd.f32 %v496, %v497
      %s499 = vtos %v498
      %v500 = vsel %vm489, %v467, 0.0
      %501 = vadd.xlane.f32.xlu0 %v500
      %v502 = vpop.xlane.xlu0 %501
      %v503 = vrot.slane %v502, 4
      %v504 = vadd.f32 %v502, %v503
      %v505 = vrot.slane %v504, 2
      %v506 = vadd.f32 %v504, %v505
      %v507 = vrot.slane %v506, 1
      %v508 = vadd.f32 %v506, %v507
      %s509 = vtos %v508
      %v510 = vlaneseq
      %v511 = vshrl.u32 %v510, 7
      %v512 = vlaneseq
      %v513 = vand.u32 %v512, 127
      %vm514 = vcmp.eq.s32.totalorder %v511, 0
      %vm515 = vcmp.eq.s32.totalorder %v513, 0
      %vm516 = vmand %vm514, %vm515
      %vm517 = vcmp.eq.s32.totalorder %v513, 1
      %vm518 = vmand %vm514, %vm517
      %v519 = vstv %s509
      %v520 = vsel %vm518, %v519, 0.0
      %v521 = vstv %s499
      %v522 = vsel %vm516, %v521, %v520
      %523 = vst [vmem:[%s458] sm:$0xff] %v522
      %p524 = scmp.lt.s32.totalorder %s22, 1
      %s525 = scalar_select %p524, %s22, 1
      %p526 = scmp.lt.s32.totalorder %s23, 0
      %s527 = scalar_select %p526, %s23, 0
      %s528 = sadd.s32 %s527, %s525
      %s529 = smul.addr %s528, 8
      %s530 = scalar_lea.vmem %s7, %s529
      // Predicated region
      $region49: #{bag_loss_with_margin.3} parent=47 // pred_check
        %p531 = pneg %p244
      $region50: #{bag_loss_with_margin.3} parent=47 // pred_check_branch
        %533 = sbr.rel (%p531) target = $region52
      $region51: #{bag_loss_with_margin.3} parent=47 // pred_region
        _
      $region52: #{bag_loss_with_margin.3} parent=47 // pred_fallthru
        _
    $region48: #{bag_loss_with_margin.3} parent=5 // pred_fallthru
      _
    %p534 = scmp.le.s32.totalorder 2, %s13
    // Predicated region
    $region53: #{bag_loss_with_margin.3} parent=5 // pred_check
      %p535 = pneg %p534
    $region54: #{bag_loss_with_margin.3} parent=5 // pred_check_branch
      %537 = sbr.rel (%p535) target = $region56
    $region55: #{bag_loss_with_margin.3} parent=5 // pred_region
      %s538 = ssub.s32 %s13, 2
      // Predicated region
      $region57: #{bag_loss_with_margin.3} parent=55 // pred_check
        %p539 = pneg %p250
      $region58: #{bag_loss_with_margin.3} parent=55 // pred_check_branch
        %541 = sbr.rel (%p539) target = $region60
      $region59: #{bag_loss_with_margin.3} parent=55 // pred_region
        %p542 = scmp.lt.s32.totalorder %s24, 1
        %s543 = scalar_select %p542, %s24, 1
        %p544 = scmp.lt.s32.totalorder %s25, 0
        %s545 = scalar_select %p544, %s25, 0
        %s546 = sadd.s32 %s545, %s543
        %s547 = smul.addr %s546, 8
        %s548 = scalar_lea.vmem %s7, %s547
      $region60: #{bag_loss_with_margin.3} parent=55 // pred_fallthru
        _
    $region56: #{bag_loss_with_margin.3} parent=5 // pred_fallthru
      _
  $region6: #{bag_loss_with_margin.3} parent=0 // loop_footer
    %s17 = sadd.s32 1, %s13
  $region7: #{bag_loss_with_margin.3} parent=0 // loop_footer_branch
    %12 = sbr.rel target = $region3
  $region8: #{bag_loss_with_margin.3} parent=0 // loop_exit
    _

</llo_original>
